<compile_context>
chip_gen: v5e
topology: v5e:2x2
jax: 0.10.0
libtpu: 0.0.40
codegen_flags: <defaults>
</compile_context>

<pallas_src>
import jax
import jax.numpy as jnp
from jax.experimental import pallas as pl
from jax.experimental.pallas import tpu as pltpu

_LANES = 128
_TB_MAX = 262_144                    # 40 B/col double-buffered -> ~10 MiB VMEM
_VMEM_LIMIT_BYTES = 32 * 1024 * 1024  # explicit: v5e default is only 16 MiB


def _round_up(x: int, m: int) -> int:
    return (x + m - 1) // m * m


def _linear_relu_kernel(w_ref, b_ref, xt_ref, ot_ref):
    """out^T[o, :] = relu(sum_k w[o, k] * x^T[k, :] + b[o]).

    w_ref : (OUT, IN) f32 in SMEM (scalar weights)
    b_ref : (OUT,)    f32 in SMEM (scalar biases)
    xt_ref: (IN, TB)  f32 in VMEM, batch on the lane axis
    ot_ref: (OUT, TB) f32 in VMEM, batch on the lane axis
    """
    out_features, in_features = w_ref.shape
    # Hoist the IN input-row loads once; reuse across all OUT outputs.
    xs = [xt_ref[k:k + 1, :] for k in range(in_features)]
    for o in range(out_features):                 # OUT = 3: fully unrolled
        acc = xs[0] * w_ref[o, 0]                 # (1, TB) VPU multiply
        for k in range(1, in_features):           # IN = 2: fully unrolled
            acc = acc + xs[k] * w_ref[o, k]
        # Direct per-row store: no concatenate / sublane-packing intermediate.
        ot_ref[o:o + 1, :] = jnp.maximum(acc + b_ref[o], 0.0)


def linear_relu_t(xt, weight, bias):
    """Fast path: xt (IN, B) -> relu(W @ xt + b), shape (OUT, B).

    Producers/consumers that can live in (features, batch) layout should call
    this directly and skip both wrapper transposes.
    """
    in_features, batch = xt.shape
    out_features, in_w = weight.shape
    assert in_w == in_features and bias.shape == (out_features,)

    # Batch tile: as large as possible (amortize the ~0.35us/step pipeline
    # overhead) but split into >= 2 grid steps whenever there is enough work
    # so v7x can shard the "parallel" axis across both TensorCores.
    tb = min(_TB_MAX, max(_LANES, _round_up(pl.cdiv(batch, 2), _LANES)))
    grid = (pl.cdiv(batch, tb),)   # ragged last block: OOB columns are dropped

    out_t = pl.pallas_call(
        _linear_relu_kernel,
        out_shape=jax.ShapeDtypeStruct((out_features, batch), jnp.float32),
        grid=grid,
        in_specs=[
            # 6 weight + 3 bias scalars live in SMEM (no padded VMEM tiles).
            pl.BlockSpec(memory_space=pltpu.MemorySpace.SMEM),
            pl.BlockSpec(memory_space=pltpu.MemorySpace.SMEM),
            pl.BlockSpec((in_features, tb), lambda i: (0, i)),
        ],
        out_specs=pl.BlockSpec((out_features, tb), lambda i: (0, i)),
        compiler_params=pltpu.CompilerParams(
            dimension_semantics=("parallel",),     # shard batch tiles over TCs
            vmem_limit_bytes=_VMEM_LIMIT_BYTES,
        ),
    )(weight.astype(jnp.float32), bias.astype(jnp.float32),
      xt.astype(jnp.float32))

    return out_t


@jax.jit
def network_pt_forward(x, weight, bias):
    """Semantic match of NetworkPt.forward: relu(x @ W.T + b), x: (B, IN)."""
    # TODO(synk): the two transposes here are layout plumbing only; callers
    # that can produce/consume (features, batch) should use linear_relu_t and
    # avoid them (or fold the input de-interleave into the kernel via a
    # contiguous reshape + pltpu.roll/select on the idle XLU/VPU slots).
    return linear_relu_t(x.T, weight, bias).T


def init_params(key, in_features=2, out_features=3):
    # torch.nn.Linear default init: U(-1/sqrt(in), 1/sqrt(in))
    kw, kb = jax.random.split(key)
    bound = 1.0 / jnp.sqrt(jnp.float32(in_features))
    weight = jax.random.uniform(
        kw, (out_features, in_features), jnp.float32, -bound, bound)
    bias = jax.random.uniform(
        kb, (out_features,), jnp.float32, -bound, bound)
    return weight, bias


if __name__ == "__main__":
    # NOTE: at the literal B=8 of the original test this op is pure launch
    # overhead; the Pallas kernel is written for (and pays off at) large batch.
    key = jax.random.PRNGKey(0)
    kx, kp = jax.random.split(key)

    IN, OUT = 2, 3
    weight, bias = init_params(kp, IN, OUT)

    for B in (8, 384):   # exercises single-block and multi-block/ragged paths
        x = jax.random.normal(jax.random.fold_in(kx, B), (B, IN), jnp.float32)
        out = jax.block_until_ready(network_pt_forward(x, weight, bias))
        ref = jnp.maximum(x @ weight.T + bias, 0.0)
        assert out.shape == (B, OUT)
        assert jnp.allclose(out, ref, atol=1e-5, rtol=1e-5), (
            f"mismatch at B={B}: max err {jnp.max(jnp.abs(out - ref))}")

    print("KERNEL_OK")
</pallas_src>

<mosaic_0001>
module attributes {stable_mosaic.version = 11 : i64} {
  func.func @_linear_relu_kernel(%arg0: i32, %arg1: memref<3x2xf32, #tpu.memory_space<smem>>, %arg2: memref<3xf32, #tpu.memory_space<smem>>, %arg3: memref<2x128xf32, #tpu.memory_space<vmem>>, %arg4: memref<3x128xf32, #tpu.memory_space<vmem>>) attributes {dimension_semantics = [#tpu.dimension_semantics<parallel>], iteration_bounds = array<i64: 1>, scalar_prefetch = 0 : i64, scratch_operands = 0 : i64, tpu.core_type = #tpu.core_type<tc>, window_params = [{transform_indices = @transform_0, window_bounds = array<i64: 3, 2>}, {transform_indices = @transform_1, window_bounds = array<i64: 3>}, {transform_indices = @transform_2, window_bounds = array<i64: 2, 128>}, {transform_indices = @transform_3, window_bounds = array<i64: 3, 128>}]} {
    %c0 = arith.constant 0 : index
    %c0_0 = arith.constant 0 : index
    %0 = vector.load %arg3[%c0, %c0_0] : memref<2x128xf32, #tpu.memory_space<vmem>>, vector<1x128xf32>
    %c1 = arith.constant 1 : index
    %c0_1 = arith.constant 0 : index
    %1 = vector.load %arg3[%c1, %c0_1] : memref<2x128xf32, #tpu.memory_space<vmem>>, vector<1x128xf32>
    %c0_2 = arith.constant 0 : index
    %c0_3 = arith.constant 0 : index
    %2 = memref.load %arg1[%c0_2, %c0_3] : memref<3x2xf32, #tpu.memory_space<smem>>
    %3 = vector.broadcast %2 : f32 to vector<1x128xf32>
    %4 = arith.mulf %0, %3 : vector<1x128xf32>
    %c0_4 = arith.constant 0 : index
    %c1_5 = arith.constant 1 : index
    %5 = memref.load %arg1[%c0_4, %c1_5] : memref<3x2xf32, #tpu.memory_space<smem>>
    %6 = vector.broadcast %5 : f32 to vector<1x128xf32>
    %7 = arith.mulf %1, %6 : vector<1x128xf32>
    %8 = arith.addf %4, %7 : vector<1x128xf32>
    %c0_6 = arith.constant 0 : index
    %9 = memref.load %arg2[%c0_6] : memref<3xf32, #tpu.memory_space<smem>>
    %10 = vector.broadcast %9 : f32 to vector<1x128xf32>
    %11 = arith.addf %8, %10 : vector<1x128xf32>
    %cst = arith.constant 0.000000e+00 : f32
    %12 = vector.broadcast %cst : f32 to vector<1x128xf32>
    %13 = arith.maximumf %11, %12 : vector<1x128xf32>
    %c0_7 = arith.constant 0 : index
    %c0_8 = arith.constant 0 : index
    %14 = vector.load %arg4[%c0_7, %c0_8] : memref<3x128xf32, #tpu.memory_space<vmem>>, vector<1x128xf32>
    tpu.vector_store %arg4[%c0_7, %c0_8], %13 {strides = array<i32>} : memref<3x128xf32, #tpu.memory_space<vmem>>, vector<1x128xf32>,
    %c1_9 = arith.constant 1 : index
    %c0_10 = arith.constant 0 : index
    %15 = memref.load %arg1[%c1_9, %c0_10] : memref<3x2xf32, #tpu.memory_space<smem>>
    %16 = vector.broadcast %15 : f32 to vector<1x128xf32>
    %17 = arith.mulf %0, %16 : vector<1x128xf32>
    %c1_11 = arith.constant 1 : index
    %c1_12 = arith.constant 1 : index
    %18 = memref.load %arg1[%c1_11, %c1_12] : memref<3x2xf32, #tpu.memory_space<smem>>
    %19 = vector.broadcast %18 : f32 to vector<1x128xf32>
    %20 = arith.mulf %1, %19 : vector<1x128xf32>
    %21 = arith.addf %17, %20 : vector<1x128xf32>
    %c1_13 = arith.constant 1 : index
    %22 = memref.load %arg2[%c1_13] : memref<3xf32, #tpu.memory_space<smem>>
    %23 = vector.broadcast %22 : f32 to vector<1x128xf32>
    %24 = arith.addf %21, %23 : vector<1x128xf32>
    %cst_14 = arith.constant 0.000000e+00 : f32
    %25 = vector.broadcast %cst_14 : f32 to vector<1x128xf32>
    %26 = arith.maximumf %24, %25 : vector<1x128xf32>
    %c1_15 = arith.constant 1 : index
    %c0_16 = arith.constant 0 : index
    %27 = vector.load %arg4[%c1_15, %c0_16] : memref<3x128xf32, #tpu.memory_space<vmem>>, vector<1x128xf32>
    tpu.vector_store %arg4[%c1_15, %c0_16], %26 {strides = array<i32>} : memref<3x128xf32, #tpu.memory_space<vmem>>, vector<1x128xf32>,
    %c2 = arith.constant 2 : index
    %c0_17 = arith.constant 0 : index
    %28 = memref.load %arg1[%c2, %c0_17] : memref<3x2xf32, #tpu.memory_space<smem>>
    %29 = vector.broadcast %28 : f32 to vector<1x128xf32>
    %30 = arith.mulf %0, %29 : vector<1x128xf32>
    %c2_18 = arith.constant 2 : index
    %c1_19 = arith.constant 1 : index
    %31 = memref.load %arg1[%c2_18, %c1_19] : memref<3x2xf32, #tpu.memory_space<smem>>
    %32 = vector.broadcast %31 : f32 to vector<1x128xf32>
    %33 = arith.mulf %1, %32 : vector<1x128xf32>
    %34 = arith.addf %30, %33 : vector<1x128xf32>
    %c2_20 = arith.constant 2 : index
    %35 = memref.load %arg2[%c2_20] : memref<3xf32, #tpu.memory_space<smem>>
    %36 = vector.broadcast %35 : f32 to vector<1x128xf32>
    %37 = arith.addf %34, %36 : vector<1x128xf32>
    %cst_21 = arith.constant 0.000000e+00 : f32
    %38 = vector.broadcast %cst_21 : f32 to vector<1x128xf32>
    %39 = arith.maximumf %37, %38 : vector<1x128xf32>
    %c2_22 = arith.constant 2 : index
    %c0_23 = arith.constant 0 : index
    %40 = vector.load %arg4[%c2_22, %c0_23] : memref<3x128xf32, #tpu.memory_space<vmem>>, vector<1x128xf32>
    tpu.vector_store %arg4[%c2_22, %c0_23], %39 {strides = array<i32>} : memref<3x128xf32, #tpu.memory_space<vmem>>, vector<1x128xf32>,
    return
  }
  func.func @transform_0(%arg0: i32) -> (i32, i32) {
    %c0_i32 = arith.constant 0 : i32
    %c0_i32_0 = arith.constant 0 : i32
    %c0_i32_1 = arith.constant 0 : i32
    return %c0_i32, %c0_i32_0 : i32, i32
  }
  func.func @transform_1(%arg0: i32) -> i32 {
    %c0_i32 = arith.constant 0 : i32
    %c0_i32_0 = arith.constant 0 : i32
    return %c0_i32 : i32
  }
  func.func @transform_2(%arg0: i32) -> (i32, i32) {
    %c0_i32 = arith.constant 0 : i32
    %c0_i32_0 = arith.constant 0 : i32
    return %c0_i32, %arg0 : i32, i32
  }
  func.func @transform_3(%arg0: i32) -> (i32, i32) {
    %c0_i32 = arith.constant 0 : i32
    %c0_i32_0 = arith.constant 0 : i32
    return %c0_i32, %arg0 : i32, i32
  }
}

</mosaic_0001>

<llo_original>
// kernel: network_pt_forward.1
$region0: #{network_pt_forward.1}
  #allocation0 [shape = 'u32[]', space=smem, size = 0x4, offset = 0x4, fixed_abs, tag = 'smem constant byte address 0x4 - core index']
  #allocation1 [shape = 'u32[72,128]{1,0:T(1,128)}', space=vmem, size = 0x9000, scoped, tag = 'internal scratch']
  %s0 = inlined_call_operand.vmem [shape: f32[3,2], index: 0, kind: input, shape index: {}]
  %s1 = inlined_call_operand.vmem [shape: f32[3], index: 1, kind: input, shape index: {}]
  %s2 = inlined_call_operand.vmem [shape: f32[2,8], index: 2, kind: input, shape index: {}]
  %s3 = inlined_call_operand.hbm [shape: f32[3,8], index: 3, kind: output, shape index: {}]
  %s4 = sld [smem:[#allocation0]]
  $region30: #{network_pt_forward.1} parent=0
    _
  %s6 = ssub.s32 1, %s4
  %s7 = scalar_select 0, %s6, %s4
  $region1: #{network_pt_forward.1} parent=0
    #allocation2 [shape = 'u8[2048]{0}', space=smem, size = 0x800, scoped, tag = 'input window, operand 0, single buffered']
    #allocation3 [shape = 's32[1]{0}', space=sflag, size = 0x4, scoped, tag = 'scoped memory for network_pt_forward.1']
    #allocation4 [shape = 's32[1]{0}', space=sflag, size = 0x4, scoped, tag = 'scoped memory for network_pt_forward.1']
    #allocation5 [shape = 'u8[512]{0}', space=smem, size = 0x200, scoped, tag = 'input window, operand 1, single buffered']
    #allocation6 [shape = 's32[1]{0}', space=sflag, size = 0x4, scoped, tag = 'scoped memory for network_pt_forward.1']
    #allocation7 [shape = 'u8[2048]{0}', space=vmem, size = 0x800, scoped, tag = 'output window, operand 0, single buffered']
    %8 = vsyncpa [#allocation4], 0
    %9 = vsyncpa [#allocation6], 0
    %10 = vsyncpa [#allocation3], 0
    // Predicated region
    $region2: #{network_pt_forward.1} parent=1 // pred_check
      _
    $region3: #{network_pt_forward.1} parent=1 // pred_check_branch
      %12 = sbr.rel (0) target = $region5
    $region4: #{network_pt_forward.1} parent=1 // pred_region
      %14 = vsyncadd [#allocation4], 0
      %s16 = sshll.u32 %s0, 4
      %s17 = int_to_ptr.vmem [resolvable:$true] %s16
      %19 = dma.vmem_to_smem %s17, 64, [#allocation2], [#allocation4]
    $region5: #{network_pt_forward.1} parent=1 // pred_fallthru
      _
    // Predicated region
    $region6: #{network_pt_forward.1} parent=1 // pred_check
      _
    $region7: #{network_pt_forward.1} parent=1 // pred_check_branch
      %21 = sbr.rel (0) target = $region9
    $region8: #{network_pt_forward.1} parent=1 // pred_region
      %23 = vsyncadd [#allocation6], 0
      %s25 = sshll.u32 %s1, 4
      %s26 = int_to_ptr.vmem [resolvable:$true] %s25
      %28 = dma.vmem_to_smem %s26, 16, [#allocation5], [#allocation6]
    $region9: #{network_pt_forward.1} parent=1 // pred_fallthru
      _
    // Predicated region
    $region10: #{network_pt_forward.1} parent=1 // pred_check
      _
    $region11: #{network_pt_forward.1} parent=1 // pred_check_branch
      %30 = sbr.rel (0) target = $region13
    $region12: #{network_pt_forward.1} parent=1 // pred_region
      _
    $region13: #{network_pt_forward.1} parent=1 // pred_fallthru
      _
    // Predicated region
    $region14: #{network_pt_forward.1} parent=1 // pred_check
      _
    $region15: #{network_pt_forward.1} parent=1 // pred_check_branch
      %32 = sbr.rel (0) target = $region17
    $region16: #{network_pt_forward.1} parent=1 // pred_region
      %34 = dma.done [#allocation4], 64
    $region17: #{network_pt_forward.1} parent=1 // pred_fallthru
      _
    // Predicated region
    $region18: #{network_pt_forward.1} parent=1 // pred_check
      _
    $region19: #{network_pt_forward.1} parent=1 // pred_check_branch
      %36 = sbr.rel (0) target = $region21
    $region20: #{network_pt_forward.1} parent=1 // pred_region
      %38 = dma.done [#allocation6], 16
    $region21: #{network_pt_forward.1} parent=1 // pred_fallthru
      _
    %39 = sfence
    %v40 = vld [vmem:[%s2] sm:$0x1]
    %v41 = vld [vmem:[%s2 + $0x1] sm:$0x1]
    %s42 = sld [smem:[#allocation2]]
    %v43 = vstv %s42
    %v44 = vmul.f32 %v40, %v43
    %s45 = sld [smem:[#allocation2 + $0x1]]
    %v46 = vstv %s45
    %v47 = vmul.f32 %v41, %v46
    %v48 = vadd.f32 %v44, %v47
    %s49 = sld [smem:[#allocation5]]
    %v50 = vstv %s49
    %v51 = vadd.f32 %v48, %v50
    %v52 = vmax.f32 %v51, 0.0
    %53 = vst [vmem:[#allocation7] sm:$0x1] %v52
    %s54 = sld [smem:[#allocation2 + $0x80]]
    %v55 = vstv %s54
    %v56 = vmul.f32 %v40, %v55
    %s57 = sld [smem:[#allocation2 + $0x81]]
    %v58 = vstv %s57
    %v59 = vmul.f32 %v41, %v58
    %v60 = vadd.f32 %v56, %v59
    %s61 = sld [smem:[#allocation5 + $0x1]]
    %v62 = vstv %s61
    %v63 = vadd.f32 %v60, %v62
    %v64 = vmax.f32 %v63, 0.0
    %65 = vst [vmem:[#allocation7 + $0x1] sm:$0x1] %v64
    %s66 = sld [smem:[#allocation2 + $0x100]]
    %v67 = vstv %s66
    %v68 = vmul.f32 %v40, %v67
    %s69 = sld [smem:[#allocation2 + $0x101]]
    %v70 = vstv %s69
    %v71 = vmul.f32 %v41, %v70
    %v72 = vadd.f32 %v68, %v71
    %s73 = sld [smem:[#allocation5 + $0x2]]
    %v74 = vstv %s73
    %v75 = vadd.f32 %v72, %v74
    %v76 = vmax.f32 %v75, 0.0
    %77 = vst [vmem:[#allocation7 + $0x2] sm:$0x1] %v76
    // Predicated region
    $region22: #{network_pt_forward.1} parent=1 // pred_check
      _
    $region23: #{network_pt_forward.1} parent=1 // pred_check_branch
      %79 = sbr.rel (0) target = $region25
    $region24: #{network_pt_forward.1} parent=1 // pred_region
      %81 = vsyncadd [#allocation3], 0
      %s83 = sshll.u32 [#allocation7], 4
      %s84 = int_to_ptr.vmem [resolvable:$true] %s83
      %s85 = sshll.u32 %s3, 4
      %s86 = int_to_ptr.hbm [resolvable:$true] %s85
      %88 = dma.vmem_to_hbm [thread:$0]  %s84, 64, %s86, [#allocation3]
    $region25: #{network_pt_forward.1} parent=1 // pred_fallthru
      _
    // Predicated region
    $region26: #{network_pt_forward.1} parent=1 // pred_check
      _
    $region27: #{network_pt_forward.1} parent=1 // pred_check_branch
      %90 = sbr.rel (0) target = $region29
    $region28: #{network_pt_forward.1} parent=1 // pred_region
      %92 = dma.done [#allocation3], 64
    $region29: #{network_pt_forward.1} parent=1 // pred_fallthru
      _
    %93 = vsyncpa [#allocation3], 1
    %94 = vsyncpa [#allocation4], 1
    %95 = vsyncpa [#allocation6], 1

</llo_original>
